<compile_context>
chip_gen: v5e
topology: v5e:2x2
jax: 0.10.0
libtpu: 0.0.40
codegen_flags: <defaults>
</compile_context>

<pallas_src>
import jax
import jax.numpy as jnp
from jax.experimental import pallas as pl
from jax.experimental.pallas import tpu as pltpu

LANE = 128      # lane width of a vreg / MXU tile edge
SUBLANE = 8     # f32 sublane quantum


def _round_up(n, m):
    return pl.cdiv(n, m) * m


def _pad2d(a, rows, cols):
    out = jnp.zeros((rows, cols), a.dtype)
    return out.at[:a.shape[0], :a.shape[1]].set(a)


def deepset_kernel(x_ref,
                   w1_ref, b1_ref,          # phi layer 1 (f32, VPU)
                   w2_ref, b2n_ref,         # phi layer 2 (bf16 MXU), bias pre-scaled by N
                   w3_ref, b3_ref,          # rho layer 1 (bf16 MXU)
                   w4_ref, b4_ref,          # rho layer 2 (bf16 MXU)
                   o_ref,
                   xsum_ref):               # (TB, H1p) f32 scratch: per-set sum of h1
    R, S = x_ref.shape                      # R = TB * N neighbor rows in this tile
    TB = o_ref.shape[0]                     # sets handled by this grid step
    N = R // TB                             # neighbors per set
    H1p = w1_ref.shape[1]

    # Slab size: keep <= ~256 rows of h1 live at a time so the working set stays
    # in vregs (no VMEM spills when TB is large). Pure-Python (static shapes).
    max_slab_rows = 256
    ch = 1
    for d in range(min(TB, max(1, max_slab_rows // N)), 0, -1):
        if TB % d == 0:
            ch = d
            break
    slab = ch * N

    w1 = w1_ref[...]                                           # (S, H1p) f32
    b1_rows = jnp.broadcast_to(b1_ref[...], (slab, H1p))       # hoisted broadcast

    # ----- phi layer 1 on the VPU (K = S is tiny) + per-set segment sum -----
    # The sum is commuted ahead of phi's second Linear, so only (TB, H1p) rows
    # ever reach the MXU. N == 8 matches the f32 sublane tile, so the
    # reshape + sum is a cheap sublane reduction (other N stays correct, just a
    # relayout). f32 keeps v5e happy (no bf16 VALU there); on v6e/v7x this loop
    # could also run in bf16 or on the now mostly-idle MXU if it ever dominates.
    for c in range(TB // ch):
        xs = x_ref[c * slab:(c + 1) * slab, :]                 # (slab, S) f32
        h = b1_rows
        for k in range(S):                                     # static unroll, S small
            h = h + xs[:, k:k + 1] * w1[k:k + 1, :]
        h = jnp.maximum(h, 0.0)                                # ReLU in f32
        xsum_ref[c * ch:(c + 1) * ch, :] = jnp.sum(h.reshape(ch, N, H1p), axis=1)

    # ----- phi layer 2 on the MXU (bf16 operands, f32 accumulate), bias = N*b2 -----
    X = xsum_ref[...]                                          # (TB, H1p) f32
    y = jnp.dot(X.astype(w2_ref.dtype), w2_ref[...],
                preferred_element_type=jnp.float32) + b2n_ref[...]   # (TB, Hp)

    # ----- rho MLP -----
    h2 = jnp.dot(y.astype(w3_ref.dtype), w3_ref[...],
                 preferred_element_type=jnp.float32) + b3_ref[...]
    h2 = jnp.maximum(h2, 0.0)
    out = jnp.dot(h2.astype(w4_ref.dtype), w4_ref[...],
                  preferred_element_type=jnp.float32) + b4_ref[...]
    o_ref[...] = out.astype(o_ref.dtype)                       # (TB, Ap) full-lane store


def _pick_sets_per_tile(B, N):
    """~512 neighbor rows per grid step (amortize per-step overhead), but keep
    >= 2 grid steps when B allows so ("parallel",) can use both TCs on v7x;
    prefer a multiple of 8 so the aggregated (TB, H) tile stays sublane-aligned."""
    tb = max(1, min(B, max(1, 512 // max(N, 1))))
    if tb >= B and B > 8:
        tb = pl.cdiv(B, 2)
    if tb > 8:
        tb -= tb % 8
    return max(1, tb)


def deepset_forward(x, params, *, sets_per_tile=None, compute_dtype=jnp.bfloat16):
    """x: (B, N, S) float32 -- B sets of N relative neighbors of dim S.
    params: phi/rho weights stored as (in, out), biases as (1, out)."""
    B, N, S = x.shape
    f32 = jnp.float32

    H1 = params["phi_w1"].shape[1]
    H = params["phi_w2"].shape[1]
    H2 = params["rho_w1"].shape[1]
    A = params["rho_w2"].shape[1]
    H1p, Hp, H2p, Ap = (_round_up(d, LANE) for d in (H1, H, H2, A))

    # Lane-padded parameters (zero padding keeps the math exact).
    w1 = _pad2d(params["phi_w1"].astype(f32), S, H1p)             # layer-1 stays f32 (VPU)
    b1 = _pad2d(params["phi_b1"].astype(f32), 1, H1p)
    w2 = _pad2d(params["phi_w2"].astype(compute_dtype), H1p, Hp)
    b2n = _pad2d((N * params["phi_b2"]).astype(f32), 1, Hp)       # bias for the commuted sum
    w3 = _pad2d(params["rho_w1"].astype(compute_dtype), Hp, H2p)
    b3 = _pad2d(params["rho_b1"].astype(f32), 1, H2p)
    w4 = _pad2d(params["rho_w2"].astype(compute_dtype), H2p, Ap)
    b4 = _pad2d(params["rho_b2"].astype(f32), 1, Ap)

    TB = sets_per_tile if sets_per_tile is not None else _pick_sets_per_tile(B, N)
    TB = max(1, min(TB, B))
    Bp = _round_up(B, TB)                                         # pad to whole tiles of sets
    x_flat = jnp.zeros((Bp * N, S), f32).at[:B * N, :].set(
        x.reshape(B * N, S).astype(f32))

    args = (x_flat, w1, b1, w2, b2n, w3, b3, w4, b4)

    # Weights/biases stay VMEM-resident across the grid; single-buffered since the
    # block index never changes (matters once hidden dims grow, esp. v7x 64 MiB VMEM).
    resident = lambda a: pl.BlockSpec(a.shape, lambda i: (0, 0),
                                      pipeline_mode=pl.Buffered(1))

    grid = (Bp // TB,)

    # Post-commute FLOP / byte estimate (advisory hint for XLA's scheduler).
    flops = 2 * Bp * N * S * H1p + 2 * Bp * (H1p * Hp + Hp * H2p + H2p * Ap)
    bytes_accessed = sum(int(a.size) * a.dtype.itemsize for a in args) + Bp * Ap * 4

    weight_bytes = sum(int(a.size) * a.dtype.itemsize for a in args[1:])
    stream_bytes = 2 * (TB * N * S * 4 + TB * Ap * 4)             # double-buffered x / out tiles
    scratch_bytes = TB * H1p * 4
    vmem_limit = int(min(96 * 2 ** 20,
                         max(32 * 2 ** 20,
                             4 * (weight_bytes + stream_bytes + scratch_bytes))))

    out = pl.pallas_call(
        deepset_kernel,
        out_shape=jax.ShapeDtypeStruct((Bp, Ap), f32),
        grid=grid,
        in_specs=[pl.BlockSpec((TB * N, S), lambda i: (i, 0))]    # streamed x tile
                 + [resident(a) for a in args[1:]],
        out_specs=pl.BlockSpec((TB, Ap), lambda i: (i, 0)),
        scratch_shapes=[pltpu.VMEM((TB, H1p), jnp.float32)],      # per-set segment-sum acc
        compiler_params=pltpu.CompilerParams(
            dimension_semantics=("parallel",),                    # megacore-shardable (v7x)
            vmem_limit_bytes=vmem_limit),
        cost_estimate=pl.CostEstimate(
            flops=int(flops), transcendentals=0, bytes_accessed=int(bytes_accessed)),
    )(*args)

    return out[:B, :A]


def init_params(key, state_dim, phi_hidden, hidden_dim, rho_hidden, action_dim):
    ks = jax.random.split(key, 8)

    def lin(kw, kb, fan_in, fan_out):
        bound = 1.0 / jnp.sqrt(fan_in)
        w = jax.random.uniform(kw, (fan_in, fan_out), jnp.float32, -bound, bound)
        b = jax.random.uniform(kb, (1, fan_out), jnp.float32, -bound, bound)
        return w, b

    p = {}
    p["phi_w1"], p["phi_b1"] = lin(ks[0], ks[1], state_dim, phi_hidden)
    p["phi_w2"], p["phi_b2"] = lin(ks[2], ks[3], phi_hidden, hidden_dim)
    p["rho_w1"], p["rho_b1"] = lin(ks[4], ks[5], hidden_dim, rho_hidden)
    p["rho_w2"], p["rho_b2"] = lin(ks[6], ks[7], rho_hidden, action_dim)
    return p


def reference_forward(x, params, compute_dtype=jnp.bfloat16):
    """Pure-JAX reference in the PyTorch module order (phi per neighbor, sum AFTER
    phi's last Linear, then rho), applying the same bf16 operand rounding the
    kernel uses on its MXU matmuls (f32 accumulation via precision=HIGHEST).
    The kernel commutes the per-set sum ahead of phi's second Linear -- exact in
    real arithmetic; the small bf16 reassociation difference is covered by the
    test tolerance."""
    f32 = jnp.float32
    hi = jax.lax.Precision.HIGHEST
    q = lambda a: a.astype(compute_dtype).astype(f32)
    B, N, S = x.shape
    xr = x.reshape(B * N, S).astype(f32)
    h1 = jnp.maximum(jnp.dot(xr, params["phi_w1"], precision=hi) + params["phi_b1"], 0.0)
    phi_out = jnp.dot(q(h1), q(params["phi_w2"]), precision=hi) + params["phi_b2"]
    X = phi_out.reshape(B, N, -1).sum(axis=1)
    h2 = jnp.maximum(jnp.dot(q(X), q(params["rho_w1"]), precision=hi) + params["rho_b1"], 0.0)
    return jnp.dot(q(h2), q(params["rho_w2"]), precision=hi) + params["rho_b2"]


if __name__ == "__main__":
    key = jax.random.PRNGKey(0)
    k_x, k_p = jax.random.split(key)

    # Small shapes consistent with the module; B=16 sets, N=8 neighbors per set
    # -> auto tile size TB=8, grid=(2,) (2 parallel steps for dual-TC parts).
    B, N = 16, 8
    state_dim = 4          # phi_layers[0].in_features
    phi_hidden = 32
    hidden_dim = 32        # phi_layers[-1].out_features
    rho_hidden = 32
    action_dim = 8         # rho_layers[-1].out_features

    x = jax.random.normal(k_x, (B, N, state_dim), dtype=jnp.float32)
    params = init_params(k_p, state_dim, phi_hidden, hidden_dim, rho_hidden, action_dim)

    out = jax.block_until_ready(deepset_forward(x, params))
    ref = reference_forward(x, params)

    assert out.shape == (B, action_dim)
    # Tolerance covers bf16 operand rounding + the (exact-in-f32) sum/W2 commute
    # reassociation; structural errors would be >10x larger.
    assert jnp.allclose(out, ref, atol=2e-2, rtol=2e-2), (
        f"mismatch vs reference: max |diff| = {jnp.max(jnp.abs(out - ref))}")

    print("KERNEL_OK")
</pallas_src>

<mosaic_0001>
module attributes {stable_mosaic.version = 11 : i64} {
  func.func @deepset_kernel(%arg0: i32, %arg1: memref<64x4xf32, #tpu.memory_space<vmem>>, %arg2: memref<4x128xf32, #tpu.memory_space<vmem>>, %arg3: memref<1x128xf32, #tpu.memory_space<vmem>>, %arg4: memref<128x128xbf16, #tpu.memory_space<vmem>>, %arg5: memref<1x128xf32, #tpu.memory_space<vmem>>, %arg6: memref<128x128xbf16, #tpu.memory_space<vmem>>, %arg7: memref<1x128xf32, #tpu.memory_space<vmem>>, %arg8: memref<128x128xbf16, #tpu.memory_space<vmem>>, %arg9: memref<1x128xf32, #tpu.memory_space<vmem>>, %arg10: memref<8x128xf32, #tpu.memory_space<vmem>>, %arg11: memref<8x128xf32, #tpu.memory_space<vmem>>) attributes {dimension_semantics = [#tpu.dimension_semantics<parallel>], iteration_bounds = array<i64: 2>, scalar_prefetch = 0 : i64, scratch_operands = 1 : i64, tpu.core_type = #tpu.core_type<tc>, window_params = [{transform_indices = @transform_0, window_bounds = array<i64: 64, 4>}, {pipeline_mode = #tpu.pipeline_mode<synchronous>, transform_indices = @transform_1, window_bounds = array<i64: 4, 128>}, {pipeline_mode = #tpu.pipeline_mode<synchronous>, transform_indices = @transform_2, window_bounds = array<i64: 1, 128>}, {pipeline_mode = #tpu.pipeline_mode<synchronous>, transform_indices = @transform_3, window_bounds = array<i64: 128, 128>}, {pipeline_mode = #tpu.pipeline_mode<synchronous>, transform_indices = @transform_4, window_bounds = array<i64: 1, 128>}, {pipeline_mode = #tpu.pipeline_mode<synchronous>, transform_indices = @transform_5, window_bounds = array<i64: 128, 128>}, {pipeline_mode = #tpu.pipeline_mode<synchronous>, transform_indices = @transform_6, window_bounds = array<i64: 1, 128>}, {pipeline_mode = #tpu.pipeline_mode<synchronous>, transform_indices = @transform_7, window_bounds = array<i64: 128, 128>}, {pipeline_mode = #tpu.pipeline_mode<synchronous>, transform_indices = @transform_8, window_bounds = array<i64: 1, 128>}, {transform_indices = @transform_9, window_bounds = array<i64: 8, 128>}]} {
    %c0 = arith.constant 0 : index
    %c0_0 = arith.constant 0 : index
    %0 = vector.load %arg2[%c0, %c0_0] : memref<4x128xf32, #tpu.memory_space<vmem>>, vector<4x128xf32>
    %c0_1 = arith.constant 0 : index
    %c0_2 = arith.constant 0 : index
    %1 = vector.load %arg3[%c0_1, %c0_2] : memref<1x128xf32, #tpu.memory_space<vmem>>, vector<1x128xf32>
    %2 = vector.shape_cast %1 : vector<1x128xf32> to vector<1x128xf32>
    %3 = vector.broadcast %2 : vector<1x128xf32> to vector<64x128xf32>
    %c0_3 = arith.constant 0 : index
    %c0_4 = arith.constant 0 : index
    %4 = vector.load %arg1[%c0_3, %c0_4] : memref<64x4xf32, #tpu.memory_space<vmem>>, vector<64x4xf32>
    %5 = vector.extract_strided_slice %4 {offsets = [0, 0], sizes = [64, 1], strides = [1, 1]} : vector<64x4xf32> to vector<64x1xf32>
    %6 = vector.extract_strided_slice %0 {offsets = [0, 0], sizes = [1, 128], strides = [1, 1]} : vector<4x128xf32> to vector<1x128xf32>
    %7 = vector.broadcast %5 : vector<64x1xf32> to vector<64x128xf32>
    %8 = vector.broadcast %6 : vector<1x128xf32> to vector<64x128xf32>
    %9 = arith.mulf %7, %8 : vector<64x128xf32>
    %10 = arith.addf %3, %9 : vector<64x128xf32>
    %11 = vector.extract_strided_slice %4 {offsets = [0, 1], sizes = [64, 1], strides = [1, 1]} : vector<64x4xf32> to vector<64x1xf32>
    %12 = vector.extract_strided_slice %0 {offsets = [1, 0], sizes = [1, 128], strides = [1, 1]} : vector<4x128xf32> to vector<1x128xf32>
    %13 = vector.broadcast %11 : vector<64x1xf32> to vector<64x128xf32>
    %14 = vector.broadcast %12 : vector<1x128xf32> to vector<64x128xf32>
    %15 = arith.mulf %13, %14 : vector<64x128xf32>
    %16 = arith.addf %10, %15 : vector<64x128xf32>
    %17 = vector.extract_strided_slice %4 {offsets = [0, 2], sizes = [64, 1], strides = [1, 1]} : vector<64x4xf32> to vector<64x1xf32>
    %18 = vector.extract_strided_slice %0 {offsets = [2, 0], sizes = [1, 128], strides = [1, 1]} : vector<4x128xf32> to vector<1x128xf32>
    %19 = vector.broadcast %17 : vector<64x1xf32> to vector<64x128xf32>
    %20 = vector.broadcast %18 : vector<1x128xf32> to vector<64x128xf32>
    %21 = arith.mulf %19, %20 : vector<64x128xf32>
    %22 = arith.addf %16, %21 : vector<64x128xf32>
    %23 = vector.extract_strided_slice %4 {offsets = [0, 3], sizes = [64, 1], strides = [1, 1]} : vector<64x4xf32> to vector<64x1xf32>
    %24 = vector.extract_strided_slice %0 {offsets = [3, 0], sizes = [1, 128], strides = [1, 1]} : vector<4x128xf32> to vector<1x128xf32>
    %25 = vector.broadcast %23 : vector<64x1xf32> to vector<64x128xf32>
    %26 = vector.broadcast %24 : vector<1x128xf32> to vector<64x128xf32>
    %27 = arith.mulf %25, %26 : vector<64x128xf32>
    %28 = arith.addf %22, %27 : vector<64x128xf32>
    %cst = arith.constant 0.000000e+00 : f32
    %29 = vector.broadcast %cst : f32 to vector<64x128xf32>
    %30 = arith.maximumf %28, %29 : vector<64x128xf32>
    %31 = vector.shape_cast %30 : vector<64x128xf32> to vector<8x8x128xf32>
    %cst_5 = arith.constant dense<0.000000e+00> : vector<8x128xf32>
    %32 = vector.multi_reduction <add>, %31, %cst_5 [1] : vector<8x8x128xf32> to vector<8x128xf32>
    %c0_6 = arith.constant 0 : index
    %c0_7 = arith.constant 0 : index
    %33 = vector.load %arg11[%c0_6, %c0_7] : memref<8x128xf32, #tpu.memory_space<vmem>>, vector<8x128xf32>
    tpu.vector_store %arg11[%c0_6, %c0_7], %32 {strides = array<i32>} : memref<8x128xf32, #tpu.memory_space<vmem>>, vector<8x128xf32>,
    %c0_8 = arith.constant 0 : index
    %c0_9 = arith.constant 0 : index
    %34 = vector.load %arg11[%c0_8, %c0_9] : memref<8x128xf32, #tpu.memory_space<vmem>>, vector<8x128xf32>
    %35 = arith.truncf %34 : vector<8x128xf32> to vector<8x128xbf16>
    %c0_10 = arith.constant 0 : index
    %c0_11 = arith.constant 0 : index
    %36 = vector.load %arg4[%c0_10, %c0_11] : memref<128x128xbf16, #tpu.memory_space<vmem>>, vector<128x128xbf16>
    %cst_12 = arith.constant dense<0.000000e+00> : vector<8x128xf32>
    %37 = tpu.matmul %35, %36, %cst_12 {dimension_numbers = #tpu.dot_dimension_numbers<[1], [0], [0], [1], [0, 0, 1, 1], [], []>} : vector<8x128xbf16>, vector<128x128xbf16>, vector<8x128xf32> -> vector<8x128xf32>
    %c0_13 = arith.constant 0 : index
    %c0_14 = arith.constant 0 : index
    %38 = vector.load %arg5[%c0_13, %c0_14] : memref<1x128xf32, #tpu.memory_space<vmem>>, vector<1x128xf32>
    %39 = vector.broadcast %38 : vector<1x128xf32> to vector<8x128xf32>
    %40 = arith.addf %37, %39 : vector<8x128xf32>
    %41 = arith.truncf %40 : vector<8x128xf32> to vector<8x128xbf16>
    %c0_15 = arith.constant 0 : index
    %c0_16 = arith.constant 0 : index
    %42 = vector.load %arg6[%c0_15, %c0_16] : memref<128x128xbf16, #tpu.memory_space<vmem>>, vector<128x128xbf16>
    %cst_17 = arith.constant dense<0.000000e+00> : vector<8x128xf32>
    %43 = tpu.matmul %41, %42, %cst_17 {dimension_numbers = #tpu.dot_dimension_numbers<[1], [0], [0], [1], [0, 0, 1, 1], [], []>} : vector<8x128xbf16>, vector<128x128xbf16>, vector<8x128xf32> -> vector<8x128xf32>
    %c0_18 = arith.constant 0 : index
    %c0_19 = arith.constant 0 : index
    %44 = vector.load %arg7[%c0_18, %c0_19] : memref<1x128xf32, #tpu.memory_space<vmem>>, vector<1x128xf32>
    %45 = vector.broadcast %44 : vector<1x128xf32> to vector<8x128xf32>
    %46 = arith.addf %43, %45 : vector<8x128xf32>
    %cst_20 = arith.constant 0.000000e+00 : f32
    %47 = vector.broadcast %cst_20 : f32 to vector<8x128xf32>
    %48 = arith.maximumf %46, %47 : vector<8x128xf32>
    %49 = arith.truncf %48 : vector<8x128xf32> to vector<8x128xbf16>
    %c0_21 = arith.constant 0 : index
    %c0_22 = arith.constant 0 : index
    %50 = vector.load %arg8[%c0_21, %c0_22] : memref<128x128xbf16, #tpu.memory_space<vmem>>, vector<128x128xbf16>
    %cst_23 = arith.constant dense<0.000000e+00> : vector<8x128xf32>
    %51 = tpu.matmul %49, %50, %cst_23 {dimension_numbers = #tpu.dot_dimension_numbers<[1], [0], [0], [1], [0, 0, 1, 1], [], []>} : vector<8x128xbf16>, vector<128x128xbf16>, vector<8x128xf32> -> vector<8x128xf32>
    %c0_24 = arith.constant 0 : index
    %c0_25 = arith.constant 0 : index
    %52 = vector.load %arg9[%c0_24, %c0_25] : memref<1x128xf32, #tpu.memory_space<vmem>>, vector<1x128xf32>
    %53 = vector.broadcast %52 : vector<1x128xf32> to vector<8x128xf32>
    %54 = arith.addf %51, %53 : vector<8x128xf32>
    %c0_26 = arith.constant 0 : index
    %c0_27 = arith.constant 0 : index
    %55 = vector.load %arg10[%c0_26, %c0_27] : memref<8x128xf32, #tpu.memory_space<vmem>>, vector<8x128xf32>
    tpu.vector_store %arg10[%c0_26, %c0_27], %54 {strides = array<i32>} : memref<8x128xf32, #tpu.memory_space<vmem>>, vector<8x128xf32>,
    return
  }
  func.func @transform_0(%arg0: i32) -> (i32, i32) {
    %c0_i32 = arith.constant 0 : i32
    %c0_i32_0 = arith.constant 0 : i32
    return %arg0, %c0_i32 : i32, i32
  }
  func.func @transform_1(%arg0: i32) -> (i32, i32) {
    %c0_i32 = arith.constant 0 : i32
    %c0_i32_0 = arith.constant 0 : i32
    %c0_i32_1 = arith.constant 0 : i32
    return %c0_i32, %c0_i32_0 : i32, i32
  }
  func.func @transform_2(%arg0: i32) -> (i32, i32) {
    %c0_i32 = arith.constant 0 : i32
    %c0_i32_0 = arith.constant 0 : i32
    %c0_i32_1 = arith.constant 0 : i32
    return %c0_i32, %c0_i32_0 : i32, i32
  }
  func.func @transform_3(%arg0: i32) -> (i32, i32) {
    %c0_i32 = arith.constant 0 : i32
    %c0_i32_0 = arith.constant 0 : i32
    %c0_i32_1 = arith.constant 0 : i32
    return %c0_i32, %c0_i32_0 : i32, i32
  }
  func.func @transform_4(%arg0: i32) -> (i32, i32) {
    %c0_i32 = arith.constant 0 : i32
    %c0_i32_0 = arith.constant 0 : i32
    %c0_i32_1 = arith.constant 0 : i32
    return %c0_i32, %c0_i32_0 : i32, i32
  }
  func.func @transform_5(%arg0: i32) -> (i32, i32) {
    %c0_i32 = arith.constant 0 : i32
    %c0_i32_0 = arith.constant 0 : i32
    %c0_i32_1 = arith.constant 0 : i32
    return %c0_i32, %c0_i32_0 : i32, i32
  }
  func.func @transform_6(%arg0: i32) -> (i32, i32) {
    %c0_i32 = arith.constant 0 : i32
    %c0_i32_0 = arith.constant 0 : i32
    %c0_i32_1 = arith.constant 0 : i32
    return %c0_i32, %c0_i32_0 : i32, i32
  }
  func.func @transform_7(%arg0: i32) -> (i32, i32) {
    %c0_i32 = arith.constant 0 : i32
    %c0_i32_0 = arith.constant 0 : i32
    %c0_i32_1 = arith.constant 0 : i32
    return %c0_i32, %c0_i32_0 : i32, i32
  }
  func.func @transform_8(%arg0: i32) -> (i32, i32) {
    %c0_i32 = arith.constant 0 : i32
    %c0_i32_0 = arith.constant 0 : i32
    %c0_i32_1 = arith.constant 0 : i32
    return %c0_i32, %c0_i32_0 : i32, i32
  }
  func.func @transform_9(%arg0: i32) -> (i32, i32) {
    %c0_i32 = arith.constant 0 : i32
    %c0_i32_0 = arith.constant 0 : i32
    return %arg0, %c0_i32 : i32, i32
  }
}

</mosaic_0001>

<llo_original>
// kernel: tpu_custom_call.1
$region0: #{tpu_custom_call.1}
  #allocation0 [shape = 'u32[]', space=smem, size = 0x4, offset = 0x4, fixed_abs, tag = 'smem constant byte address 0x4 - core index']
  #allocation1 [shape = 'u32[72,128]{1,0:T(1,128)}', space=vmem, size = 0x9000, scoped, tag = 'internal scratch']
  #allocation2 [shape = 'f32[8,128]{1,0:T(8,128)}', space=vmem, size = 0x1000, scoped, tag = 'scratch operand']
  %s0 = inlined_call_operand.vmem [shape: f32[128,4], index: 0, kind: input, shape index: {}]
  %s1 = inlined_call_operand.vmem [shape: f32[4,128], index: 1, kind: input, shape index: {}]
  %s2 = inlined_call_operand.vmem [shape: f32[1,128], index: 2, kind: input, shape index: {}]
  %s3 = inlined_call_operand.vmem [shape: bf16[128,128], index: 3, kind: input, shape index: {}]
  %s4 = inlined_call_operand.vmem [shape: f32[1,128], index: 4, kind: input, shape index: {}]
  %s5 = inlined_call_operand.vmem [shape: bf16[128,128], index: 5, kind: input, shape index: {}]
  %s6 = inlined_call_operand.vmem [shape: f32[1,128], index: 6, kind: input, shape index: {}]
  %s7 = inlined_call_operand.hbm [shape: bf16[128,128], index: 7, kind: input, shape index: {}]
  %s8 = inlined_call_operand.vmem [shape: f32[1,128], index: 8, kind: input, shape index: {}]
  %s9 = inlined_call_operand.hbm [shape: f32[16,128], index: 9, kind: output, shape index: {}]
  %s10 = sld [smem:[#allocation0]]
  $region73: #{tpu_custom_call.1} parent=0
    _
  %s12 = ssub.s32 1, %s10
  %s13 = scalar_select 0, %s12, %s10
  $region1: #{tpu_custom_call.1} parent=0
    #allocation3 [shape = 'u8[32768]{0}', space=vmem, size = 0x8000, scoped, tag = 'input window, operand 7, single buffered']
    #allocation4 [shape = 's32[2]{0}', space=sflag, size = 0x8, scoped, tag = 'scoped memory for tpu_custom_call.1']
    #allocation5 [shape = 's32[2]{0}', space=sflag, size = 0x8, scoped, tag = 'scoped memory for tpu_custom_call.1']
    #allocation6 [shape = 'u8[8192]{0}', space=vmem, size = 0x2000, scoped, tag = 'output window, operand 0']
    %14 = vsyncpa [#allocation4], 0
    %15 = vsyncpa [#allocation5], 0
    %s16 = scalar_lea.sflag [#allocation5], 1
    %17 = vsyncpa %s16, 0
    loop: start=0, step=1, limit=4
    $region2: #{tpu_custom_call.1} parent=1 // loop_pre_header
      _
    $region3: #{tpu_custom_call.1} parent=1 // loop_header
      %s19 = sphi 0, %s23
      %p20 = scmp.ge.s32.totalorder %s19, 4
      %s29 = sphi 0, %s31
      %s32 = sphi 0, %s29
      %s33 = sphi 0, %s32
      %s49 = sphi 0, %s33
      %s53 = sphi 0, %s53
      %s55 = sphi 0, %s53
      %s56 = sphi 0, %s55
      %s70 = sphi 0, %s56
      %s74 = sphi 0, %s74
      %s76 = sphi 0, %s74
      %s77 = sphi 0, %s76
      %s91 = sphi 0, %s77
      %s95 = sphi 0, %s95
      %s97 = sphi 0, %s95
      %s98 = sphi 0, %s97
      %s112 = sphi 0, %s98
      %s116 = sphi 0, %s116
      %s118 = sphi 0, %s116
      %s119 = sphi 0, %s118
      %s133 = sphi 0, %s119
      %s137 = sphi 0, %s137
      %s139 = sphi 0, %s137
      %s140 = sphi 0, %s139
      %s154 = sphi 0, %s140
      %s158 = sphi 0, %s158
      %s160 = sphi 0, %s158
      %s161 = sphi 0, %s160
      %s175 = sphi 0, %s161
      %s179 = sphi 0, %s179
      %s181 = sphi 0, %s179
      %s182 = sphi 0, %s181
      %s196 = sphi 0, %s182
      %s200 = sphi 0, %s200
      %s202 = sphi 0, %s200
      %s203 = sphi 0, %s202
      %s217 = sphi 0, %s203
      %s223 = sphi 0, %s225
      %s226 = sphi 0, %s223
      %s227 = sphi 0, %s226
      %s243 = sphi 0, %s227
    $region4: #{tpu_custom_call.1} parent=1 // loop_header_branch
      %22 = sbr.rel (%p20) target = $region8
    $region5: #{tpu_custom_call.1} parent=1 // loop_body
      %s24 = ssub.s32 %s19, 1
      %s25 = ssub.s32 %s19, 2
      %s26 = sadd.s32 %s19, 1
      %s27 = ssub.s32 %s19, %s26
      %p28 = scmp.eq.s32.totalorder %s27, 0
      %s30 = sadd.s32 %s29, 1
      %s31 = scalar_select %p28, %s29, %s30
      %p34 = pneg %p28
      %p35 = scmp.eq.s32.totalorder %s19, 1
      %p36 = por %p34, %p35
      %p37 = scmp.ne.s32.totalorder %s29, %s32
      %p38 = scmp.eq.s32.totalorder %s19, 0
      %p39 = por %p37, %p38
      %p40 = scmp.ne.s32.totalorder %s29, %s32
      %p41 = scmp.eq.s32.totalorder %s24, 1
      %p42 = por %p40, %p41
      %p43 = scmp.ne.s32.totalorder %s32, %s33
      %p44 = scmp.eq.s32.totalorder %s24, 0
      %p45 = por %p43, %p44
      %p46 = scmp.ne.s32.totalorder %s32, %s33
      %p47 = scmp.eq.s32.totalorder %s25, 1
      %p48 = por %p46, %p47
      %p50 = scmp.ne.s32.totalorder %s33, %s49
      %p51 = scmp.eq.s32.totalorder %s25, 0
      %p52 = por %p50, %p51
      %s54 = sadd.s32 %s53, 1
      %p57 = scmp.eq.s32.totalorder %s19, 1
      %p58 = scmp.ne.s32.totalorder %s53, %s55
      %p59 = scmp.eq.s32.totalorder %s19, 0
      %p60 = por %p58, %p59
      %p61 = scmp.ne.s32.totalorder %s53, %s55
      %p62 = scmp.eq.s32.totalorder %s24, 1
      %p63 = por %p61, %p62
      %p64 = scmp.ne.s32.totalorder %s55, %s56
      %p65 = scmp.eq.s32.totalorder %s24, 0
      %p66 = por %p64, %p65
      %p67 = scmp.ne.s32.totalorder %s55, %s56
      %p68 = scmp.eq.s32.totalorder %s25, 1
      %p69 = por %p67, %p68
      %p71 = scmp.ne.s32.totalorder %s56, %s70
      %p72 = scmp.eq.s32.totalorder %s25, 0
      %p73 = por %p71, %p72
      %s75 = sadd.s32 %s74, 1
      %p78 = scmp.eq.s32.totalorder %s19, 1
      %p79 = scmp.ne.s32.totalorder %s74, %s76
      %p80 = scmp.eq.s32.totalorder %s19, 0
      %p81 = por %p79, %p80
      %p82 = scmp.ne.s32.totalorder %s74, %s76
      %p83 = scmp.eq.s32.totalorder %s24, 1
      %p84 = por %p82, %p83
      %p85 = scmp.ne.s32.totalorder %s76, %s77
      %p86 = scmp.eq.s32.totalorder %s24, 0
      %p87 = por %p85, %p86
      %p88 = scmp.ne.s32.totalorder %s76, %s77
      %p89 = scmp.eq.s32.totalorder %s25, 1
      %p90 = por %p88, %p89
      %p92 = scmp.ne.s32.totalorder %s77, %s91
      %p93 = scmp.eq.s32.totalorder %s25, 0
      %p94 = por %p92, %p93
      %s96 = sadd.s32 %s95, 1
      %p99 = scmp.eq.s32.totalorder %s19, 1
      %p100 = scmp.ne.s32.totalorder %s95, %s97
      %p101 = scmp.eq.s32.totalorder %s19, 0
      %p102 = por %p100, %p101
      %p103 = scmp.ne.s32.totalorder %s95, %s97
      %p104 = scmp.eq.s32.totalorder %s24, 1
      %p105 = por %p103, %p104
      %p106 = scmp.ne.s32.totalorder %s97, %s98
      %p107 = scmp.eq.s32.totalorder %s24, 0
      %p108 = por %p106, %p107
      %p109 = scmp.ne.s32.totalorder %s97, %s98
      %p110 = scmp.eq.s32.totalorder %s25, 1
      %p111 = por %p109, %p110
      %p113 = scmp.ne.s32.totalorder %s98, %s112
      %p114 = scmp.eq.s32.totalorder %s25, 0
      %p115 = por %p113, %p114
      %s117 = sadd.s32 %s116, 1
      %p120 = scmp.eq.s32.totalorder %s19, 1
      %p121 = scmp.ne.s32.totalorder %s116, %s118
      %p122 = scmp.eq.s32.totalorder %s19, 0
      %p123 = por %p121, %p122
      %p124 = scmp.ne.s32.totalorder %s116, %s118
      %p125 = scmp.eq.s32.totalorder %s24, 1
      %p126 = por %p124, %p125
      %p127 = scmp.ne.s32.totalorder %s118, %s119
      %p128 = scmp.eq.s32.totalorder %s24, 0
      %p129 = por %p127, %p128
      %p130 = scmp.ne.s32.totalorder %s118, %s119
      %p131 = scmp.eq.s32.totalorder %s25, 1
      %p132 = por %p130, %p131
      %p134 = scmp.ne.s32.totalorder %s119, %s133
      %p135 = scmp.eq.s32.totalorder %s25, 0
      %p136 = por %p134, %p135
      %s138 = sadd.s32 %s137, 1
      %p141 = scmp.eq.s32.totalorder %s19, 1
      %p142 = scmp.ne.s32.totalorder %s137, %s139
      %p143 = scmp.eq.s32.totalorder %s19, 0
      %p144 = por %p142, %p143
      %p145 = scmp.ne.s32.totalorder %s137, %s139
      %p146 = scmp.eq.s32.totalorder %s24, 1
      %p147 = por %p145, %p146
      %p148 = scmp.ne.s32.totalorder %s139, %s140
      %p149 = scmp.eq.s32.totalorder %s24, 0
      %p150 = por %p148, %p149
      %p151 = scmp.ne.s32.totalorder %s139, %s140
      %p152 = scmp.eq.s32.totalorder %s25, 1
      %p153 = por %p151, %p152
      %p155 = scmp.ne.s32.totalorder %s140, %s154
      %p156 = scmp.eq.s32.totalorder %s25, 0
      %p157 = por %p155, %p156
      %s159 = sadd.s32 %s158, 1
      %p162 = scmp.eq.s32.totalorder %s19, 1
      %p163 = scmp.ne.s32.totalorder %s158, %s160
      %p164 = scmp.eq.s32.totalorder %s19, 0
      %p165 = por %p163, %p164
      %p166 = scmp.ne.s32.totalorder %s158, %s160
      %p167 = scmp.eq.s32.totalorder %s24, 1
      %p168 = por %p166, %p167
      %p169 = scmp.ne.s32.totalorder %s160, %s161
      %p170 = scmp.eq.s32.totalorder %s24, 0
      %p171 = por %p169, %p170
      %p172 = scmp.ne.s32.totalorder %s160, %s161
      %p173 = scmp.eq.s32.totalorder %s25, 1
      %p174 = por %p172, %p173
      %p176 = scmp.ne.s32.totalorder %s161, %s175
      %p177 = scmp.eq.s32.totalorder %s25, 0
      %p178 = por %p176, %p177
      %s180 = sadd.s32 %s179, 1
      %p183 = scmp.eq.s32.totalorder %s19, 1
      %p184 = scmp.ne.s32.totalorder %s179, %s181
      %p185 = scmp.eq.s32.totalorder %s19, 0
      %p186 = por %p184, %p185
      %p187 = scmp.ne.s32.totalorder %s179, %s181
      %p188 = scmp.eq.s32.totalorder %s24, 1
      %p189 = por %p187, %p188
      %p190 = scmp.ne.s32.totalorder %s181, %s182
      %p191 = scmp.eq.s32.totalorder %s24, 0
      %p192 = por %p190, %p191
      %p193 = scmp.ne.s32.totalorder %s181, %s182
      %p194 = scmp.eq.s32.totalorder %s25, 1
      %p195 = por %p193, %p194
      %p197 = scmp.ne.s32.totalorder %s182, %s196
      %p198 = scmp.eq.s32.totalorder %s25, 0
      %p199 = por %p197, %p198
      %s201 = sadd.s32 %s200, 1
      %p204 = scmp.eq.s32.totalorder %s19, 1
      %p205 = scmp.ne.s32.totalorder %s200, %s202
      %p206 = scmp.eq.s32.totalorder %s19, 0
      %p207 = por %p205, %p206
      %p208 = scmp.ne.s32.totalorder %s200, %s202
      %p209 = scmp.eq.s32.totalorder %s24, 1
      %p210 = por %p208, %p209
      %p211 = scmp.ne.s32.totalorder %s202, %s203
      %p212 = scmp.eq.s32.totalorder %s24, 0
      %p213 = por %p211, %p212
      %p214 = scmp.ne.s32.totalorder %s202, %s203
      %p215 = scmp.eq.s32.totalorder %s25, 1
      %p216 = por %p214, %p215
      %p218 = scmp.ne.s32.totalorder %s203, %s217
      %p219 = scmp.eq.s32.totalorder %s25, 0
      %p220 = por %p218, %p219
      %s221 = ssub.s32 %s19, %s26
      %p222 = scmp.eq.s32.totalorder %s221, 0
      %s224 = sadd.s32 %s223, 1
      %s225 = scalar_select %p222, %s223, %s224
      %p228 = pneg %p222
      %p229 = scmp.eq.s32.totalorder %s19, 1
      %p230 = por %p228, %p229
      %p231 = scmp.ne.s32.totalorder %s223, %s226
      %p232 = scmp.eq.s32.totalorder %s19, 0
      %p233 = por %p231, %p232
      %p234 = scmp.ne.s32.totalorder %s223, %s226
      %p235 = scmp.eq.s32.totalorder %s24, 1
      %p236 = por %p234, %p235
      %p237 = scmp.ne.s32.totalorder %s226, %s227
      %p238 = scmp.eq.s32.totalorder %s24, 0
      %p239 = por %p237, %p238
      %p240 = scmp.ne.s32.totalorder %s226, %s227
      %p241 = scmp.eq.s32.totalorder %s25, 1
      %p242 = por %p240, %p241
      %p244 = scmp.ne.s32.totalorder %s227, %s243
      %p245 = scmp.eq.s32.totalorder %s25, 0
      %p246 = por %p244, %p245
      %p247 = scmp.le.s32.totalorder 1, %s19
      %p248 = scmp.lt.s32.totalorder %s19, 3
      %p249 = pnand %p247, %p248
      %p250 = pneg %p249
      // Predicated region
      $region9: #{tpu_custom_call.1} parent=5 // pred_check
        _
      $region10: #{tpu_custom_call.1} parent=5 // pred_check_branch
        %252 = sbr.rel (%p249) target = $region12
      $region11: #{tpu_custom_call.1} parent=5 // pred_region
        %s253 = ssub.s32 %s19, 1
        // Predicated region
        $region13: #{tpu_custom_call.1} parent=11 // pred_check
          %p254 = pneg %p66
        $region14: #{tpu_custom_call.1} parent=11 // pred_check_branch
          %256 = sbr.rel (%p254) target = $region16
        $region15: #{tpu_custom_call.1} parent=11 // pred_region
          _
        $region16: #{tpu_custom_call.1} parent=11 // pred_fallthru
          _
        // Predicated region
        $region17: #{tpu_custom_call.1} parent=11 // pred_check
          %p257 = pneg %p87
        $region18: #{tpu_custom_call.1} parent=11 // pred_check_branch
          %259 = sbr.rel (%p257) target = $region20
        $region19: #{tpu_custom_call.1} parent=11 // pred_region
          _
        $region20: #{tpu_custom_call.1} parent=11 // pred_fallthru
          _
        // Predicated region
        $region21: #{tpu_custom_call.1} parent=11 // pred_check
          %p260 = pneg %p108
        $region22: #{tpu_custom_call.1} parent=11 // pred_check_branch
          %262 = sbr.rel (%p260) target = $region24
        $region23: #{tpu_custom_call.1} parent=11 // pred_region
          _
        $region24: #{tpu_custom_call.1} parent=11 // pred_fallthru
          _
        // Predicated region
        $region25: #{tpu_custom_call.1} parent=11 // pred_check
          %p263 = pneg %p129
        $region26: #{tpu_custom_call.1} parent=11 // pred_check_branch
          %265 = sbr.rel (%p263) target = $region28
        $region27: #{tpu_custom_call.1} parent=11 // pred_region
          _
        $region28: #{tpu_custom_call.1} parent=11 // pred_fallthru
          _
        // Predicated region
        $region29: #{tpu_custom_call.1} parent=11 // pred_check
          %p266 = pneg %p150
        $region30: #{tpu_custom_call.1} parent=11 // pred_check_branch
          %268 = sbr.rel (%p266) target = $region32
        $region31: #{tpu_custom_call.1} parent=11 // pred_region
          _
        $region32: #{tpu_custom_call.1} parent=11 // pred_fallthru
          _
        // Predicated region
        $region33: #{tpu_custom_call.1} parent=11 // pred_check
          %p269 = pneg %p171
        $region34: #{tpu_custom_call.1} parent=11 // pred_check_branch
          %271 = sbr.rel (%p269) target = $region36
        $region35: #{tpu_custom_call.1} parent=11 // pred_region
          _
        $region36: #{tpu_custom_call.1} parent=11 // pred_fallthru
          _
        // Predicated region
        $region37: #{tpu_custom_call.1} parent=11 // pred_check
          %p272 = pneg %p192
        $region38: #{tpu_custom_call.1} parent=11 // pred_check_branch
          %274 = sbr.rel (%p272) target = $region40
        $region39: #{tpu_custom_call.1} parent=11 // pred_region
          %276 = vsyncadd [#allocation4], 0
          %s277 = sshll.u32 %s7, 4
          %s278 = int_to_ptr.hbm [resolvable:$true] %s277
          %s279 = sshll.u32 [#allocation3], 4
          %s280 = int_to_ptr.vmem [resolvable:$true] %s279
          %285 = dma.hbm_to_vmem [thread:$0]  %s278, 1024, %s280, [#allocation4], 64, 64, 4
        $region40: #{tpu_custom_call.1} parent=11 // pred_fallthru
          _
        // Predicated region
        $region41: #{tpu_custom_call.1} parent=11 // pred_check
          %p286 = pneg %p213
        $region42: #{tpu_custom_call.1} parent=11 // pred_check_branch
          %288 = sbr.rel (%p286) target = $region44
        $region43: #{tpu_custom_call.1} parent=11 // pred_region
          _
        $region44: #{tpu_custom_call.1} parent=11 // pred_fallthru
          _
      $region12: #{tpu_custom_call.1} parent=5 // pred_fallthru
        _
      %p289 = scmp.lt.s32.totalorder %s19, 2
      // Predicated region
      $region45: #{tpu_custom_call.1} parent=5 // pred_check
        %p290 = pneg %p289
      $region46: #{tpu_custom_call.1} parent=5 // pred_check_branch
        %292 = sbr.rel (%p290) target = $region48
      $region47: #{tpu_custom_call.1} parent=5 // pred_region
        // Predicated region
        $region49: #{tpu_custom_call.1} parent=47 // pred_check
          %p293 = pneg %p39
        $region50: #{tpu_custom_call.1} parent=47 // pred_check_branch
          %295 = sbr.rel (%p293) target = $region52
        $region51: #{tpu_custom_call.1} parent=47 // pred_region
          %s296 = smul.u32 8, %s19
          %p297 = scmp.lt.s32.totalorder %s296, 15
          %s298 = scalar_select %p297, %s296, 15
          %s299 = smul.addr %s298, 8
          %s300 = scalar_lea.vmem %s0, %s299
          %s301 = smul.u32 8, %s19
        $region52: #{tpu_custom_call.1} parent=47 // pred_fallthru
          _
      $region48: #{tpu_custom_call.1} parent=5 // pred_fallthru
        _
      %p302 = scmp.le.s32.totalorder 1, %s19
      %p303 = scmp.lt.s32.totalorder %s19, 3
      %p304 = pnand %p302, %p303
      %p305 = pneg %p304
      // Predicated region
      $region53: #{tpu_custom_call.1} parent=5 // pred_check
        _
      $region54: #{tpu_custom_call.1} parent=5 // pred_check_branch
        %307 = sbr.rel (%p304) target = $region56
      $region55: #{tpu_custom_call.1} parent=5 // pred_region
        %s308 = ssub.s32 %s19, 1
        // Predicated region
        $region57: #{tpu_custom_call.1} parent=55 // pred_check
          %p309 = pneg %p192
        $region58: #{tpu_custom_call.1} parent=55 // pred_check_branch
          %311 = sbr.rel (%p309) target = $region60
        $region59: #{tpu_custom_call.1} parent=55 // pred_region
          %313 = dma.done [#allocation4], 1024
        $region60: #{tpu_custom_call.1} parent=55 // pred_fallthru
          _
        %s314 = smul.u32 8, %s24
        %p315 = scmp.lt.s32.totalorder %s314, 15
        %s316 = scalar_select %p315, %s314, 15
        %s317 = smul.addr %s316, 8
        %s318 = scalar_lea.vmem %s0, %s317
        %p319 = pneg %p45
        %p320 = pneg %p42
        %p321 = pneg %p66
        %p322 = pneg %p63
        %p323 = pneg %p87
        %p324 = pneg %p84
        %p325 = pneg %p108
        %p326 = pneg %p105
        %p327 = pneg %p129
        %p328 = pneg %p126
        %p329 = pneg %p150
        %p330 = pneg %p147
        %p331 = pneg %p171
        %p332 = pneg %p168
        %p333 = pneg %p192
        %p334 = pneg %p189
        %p335 = pneg %p213
        %p336 = pneg %p210
        %p337 = pneg %p239
        %p338 = pneg %p236
        %s339 = sand.u32 %s226, 1
        %s340 = scalar_lea.sflag [#allocation5], %s339
        %s341 = sand.u32 %s226, 1
        %s342 = smul.addr %s341, 8
        %s343 = scalar_lea.vmem [#allocation6], %s342
        %s344 = smul.u32 8, %s24
        %p345 = scmp.lt.s32.totalorder %s344, 15
        %s346 = scalar_select %p345, %s344, 15
        %s347 = smul.addr %s346, 8
        %s348 = scalar_lea.vmem %s0, %s347
        %s349 = smul.u32 8, %s24
        %v350 = vld [vmem:[%s1] sm:$0xf]
        %v351 = vld [vmem:[%s2] sm:$0x1]
        %v353 = vperm.slane %v351, 0
        %v355 = vld [vmem:[%s348] sm:$0xff]
        %v356 = vld [vmem:[%s348 + $0x8] sm:$0xff]
        %v357 = vld [vmem:[%s348 + $0x10] sm:$0xff]
        %v358 = vld [vmem:[%s348 + $0x18] sm:$0xff]
        %v359 = vld [vmem:[%s348 + $0x20] sm:$0xff]
        %v360 = vld [vmem:[%s348 + $0x28] sm:$0xff]
        %v361 = vld [vmem:[%s348 + $0x30] sm:$0xff]
        %v362 = vld [vmem:[%s348 + $0x38] sm:$0xff]
        %364 = vset.pattern.permute.xlu0 0
        %365 = vperm.xlu0 %364, %v355
        %v366 = vpop.permute.xlu0 %365
        %369 = vset.pattern.permute.xlu0 0
        %370 = vperm.xlu0 %369, %v356
        %v371 = vpop.permute.xlu0 %370
        %374 = vset.pattern.permute.xlu0 0
        %375 = vperm.xlu0 %374, %v357
        %v376 = vpop.permute.xlu0 %375
        %379 = vset.pattern.permute.xlu0 0
        %380 = vperm.xlu0 %379, %v358
        %v381 = vpop.permute.xlu0 %380
        %384 = vset.pattern.permute.xlu0 0
        %385 = vperm.xlu0 %384, %v359
        %v386 = vpop.permute.xlu0 %385
        %389 = vset.pattern.permute.xlu0 0
        %390 = vperm.xlu0 %389, %v360
        %v391 = vpop.permute.xlu0 %390
        %394 = vset.pattern.permute.xlu0 0
        %395 = vperm.xlu0 %394, %v361
        %v396 = vpop.permute.xlu0 %395
        %399 = vset.pattern.permute.xlu0 0
        %400 = vperm.xlu0 %399, %v362
        %v401 = vpop.permute.xlu0 %400
        %v403 = vperm.slane %v350, 0
        %v404 = vmul.f32 %v366, %v403
        %v405 = vmul.f32 %v371, %v403
        %v406 = vmul.f32 %v376, %v403
        %v407 = vmul.f32 %v381, %v403
        %v408 = vmul.f32 %v386, %v403
        %v409 = vmul.f32 %v391, %v403
        %v410 = vmul.f32 %v396, %v403
        %v411 = vmul.f32 %v401, %v403
        %v412 = vadd.f32 %v353, %v404
        %v413 = vadd.f32 %v353, %v405
        %v414 = vadd.f32 %v353, %v406
        %v415 = vadd.f32 %v353, %v407
        %v416 = vadd.f32 %v353, %v408
        %v417 = vadd.f32 %v353, %v409
        %v418 = vadd.f32 %v353, %v410
        %v419 = vadd.f32 %v353, %v411
        %420 = vset.pattern.permute.xlu0 1
        %421 = vperm.xlu0 %420, %v355
        %v422 = vpop.permute.xlu0 %421
        %424 = vset.pattern.permute.xlu0 1
        %425 = vperm.xlu0 %424, %v356
        %v426 = vpop.permute.xlu0 %425
        %428 = vset.pattern.permute.xlu0 1
        %429 = vperm.xlu0 %428, %v357
        %v430 = vpop.permute.xlu0 %429
        %432 = vset.pattern.permute.xlu0 1
        %433 = vperm.xlu0 %432, %v358
        %v434 = vpop.permute.xlu0 %433
        %436 = vset.pattern.permute.xlu0 1
        %437 = vperm.xlu0 %436, %v359
        %v438 = vpop.permute.xlu0 %437
        %440 = vset.pattern.permute.xlu0 1
        %441 = vperm.xlu0 %440, %v360
        %v442 = vpop.permute.xlu0 %441
        %444 = vset.pattern.permute.xlu0 1
        %445 = vperm.xlu0 %444, %v361
        %v446 = vpop.permute.xlu0 %445
        %448 = vset.pattern.permute.xlu0 1
        %449 = vperm.xlu0 %448, %v362
        %v450 = vpop.permute.xlu0 %449
        %v452 = vperm.slane %v350, 1
        %v453 = vmul.f32 %v422, %v452
        %v454 = vmul.f32 %v426, %v452
        %v455 = vmul.f32 %v430, %v452
        %v456 = vmul.f32 %v434, %v452
        %v457 = vmul.f32 %v438, %v452
        %v458 = vmul.f32 %v442, %v452
        %v459 = vmul.f32 %v446, %v452
        %v460 = vmul.f32 %v450, %v452
        %v461 = vadd.f32 %v412, %v453
        %v462 = vadd.f32 %v413, %v454
        %v463 = vadd.f32 %v414, %v455
        %v464 = vadd.f32 %v415, %v456
        %v465 = vadd.f32 %v416, %v457
        %v466 = vadd.f32 %v417, %v458
        %v467 = vadd.f32 %v418, %v459
        %v468 = vadd.f32 %v419, %v460
        %469 = vset.pattern.permute.xlu0 2
        %470 = vperm.xlu0 %469, %v355
        %v471 = vpop.permute.xlu0 %470
        %473 = vset.pattern.permute.xlu0 2
        %474 = vperm.xlu0 %473, %v356
        %v475 = vpop.permute.xlu0 %474
        %477 = vset.pattern.permute.xlu0 2
        %478 = vperm.xlu0 %477, %v357
        %v479 = vpop.permute.xlu0 %478
        %481 = vset.pattern.permute.xlu0 2
        %482 = vperm.xlu0 %481, %v358
        %v483 = vpop.permute.xlu0 %482
        %485 = vset.pattern.permute.xlu0 2
        %486 = vperm.xlu0 %485, %v359
        %v487 = vpop.permute.xlu0 %486
        %489 = vset.pattern.permute.xlu0 2
        %490 = vperm.xlu0 %489, %v360
        %v491 = vpop.permute.xlu0 %490
        %493 = vset.pattern.permute.xlu0 2
        %494 = vperm.xlu0 %493, %v361
        %v495 = vpop.permute.xlu0 %494
        %497 = vset.pattern.permute.xlu0 2
        %498 = vperm.xlu0 %497, %v362
        %v499 = vpop.permute.xlu0 %498
        %v501 = vperm.slane %v350, 2
        %v502 = vmul.f32 %v471, %v501
        %v503 = vmul.f32 %v475, %v501
        %v504 = vmul.f32 %v479, %v501
        %v505 = vmul.f32 %v483, %v501
        %v506 = vmul.f32 %v487, %v501
        %v507 = vmul.f32 %v491, %v501
        %v508 = vmul.f32 %v495, %v501
        %v509 = vmul.f32 %v499, %v501
        %v510 = vadd.f32 %v461, %v502
        %v511 = vadd.f32 %v462, %v503
        %v512 = vadd.f32 %v463, %v504
        %v513 = vadd.f32 %v464, %v505
        %v514 = vadd.f32 %v465, %v506
        %v515 = vadd.f32 %v466, %v507
        %v516 = vadd.f32 %v467, %v508
        %v517 = vadd.f32 %v468, %v509
        %518 = vset.pattern.permute.xlu0 3
        %519 = vperm.xlu0 %518, %v355
        %v520 = vpop.permute.xlu0 %519
        %522 = vset.pattern.permute.xlu0 3
        %523 = vperm.xlu0 %522, %v356
        %v524 = vpop.permute.xlu0 %523
        %526 = vset.pattern.permute.xlu0 3
        %527 = vperm.xlu0 %526, %v357
        %v528 = vpop.permute.xlu0 %527
        %530 = vset.pattern.permute.xlu0 3
        %531 = vperm.xlu0 %530, %v358
        %v532 = vpop.permute.xlu0 %531
        %534 = vset.pattern.permute.xlu0 3
        %535 = vperm.xlu0 %534, %v359
        %v536 = vpop.permute.xlu0 %535
        %538 = vset.pattern.permute.xlu0 3
        %539 = vperm.xlu0 %538, %v360
        %v540 = vpop.permute.xlu0 %539
        %542 = vset.pattern.permute.xlu0 3
        %543 = vperm.xlu0 %542, %v361
        %v544 = vpop.permute.xlu0 %543
        %546 = vset.pattern.permute.xlu0 3
        %547 = vperm.xlu0 %546, %v362
        %v548 = vpop.permute.xlu0 %547
        %v550 = vperm.slane %v350, 3
        %v551 = vmul.f32 %v520, %v550
        %v552 = vmul.f32 %v524, %v550
        %v553 = vmul.f32 %v528, %v550
        %v554 = vmul.f32 %v532, %v550
        %v555 = vmul.f32 %v536, %v550
        %v556 = vmul.f32 %v540, %v550
        %v557 = vmul.f32 %v544, %v550
        %v558 = vmul.f32 %v548, %v550
        %v559 = vadd.f32 %v510, %v551
        %v560 = vadd.f32 %v511, %v552
        %v561 = vadd.f32 %v512, %v553
        %v562 = vadd.f32 %v513, %v554
        %v563 = vadd.f32 %v514, %v555
        %v564 = vadd.f32 %v515, %v556
        %v565 = vadd.f32 %v516, %v557
        %v566 = vadd.f32 %v517, %v558
        %v567 = vmax.f32 %v559, 0.0
        %v568 = vmax.f32 %v560, 0.0
        %v569 = vmax.f32 %v561, 0.0
        %v570 = vmax.f32 %v562, 0.0
        %v571 = vmax.f32 %v563, 0.0
        %v572 = vmax.f32 %v564, 0.0
        %v573 = vmax.f32 %v565, 0.0
        %v574 = vmax.f32 %v566, 0.0
        %v575 = vrot.slane %v567, 4
        %v576 = vadd.f32 %v567, %v575
        %v577 = vrot.slane %v576, 2
        %v578 = vadd.f32 %v576, %v577
        %v579 = vrot.slane %v578, 1
        %v580 = vadd.f32 %v578, %v579
        %v581 = vrot.slane %v568, 4
        %v582 = vadd.f32 %v568, %v581
        %v583 = vrot.slane %v582, 2
        %v584 = vadd.f32 %v582, %v583
        %v585 = vrot.slane %v584, 1
        %v586 = vadd.f32 %v584, %v585
        %v587 = vrot.slane %v569, 4
        %v588 = vadd.f32 %v569, %v587
        %v589 = vrot.slane %v588, 2
        %v590 = vadd.f32 %v588, %v589
        %v591 = vrot.slane %v590, 1
        %v592 = vadd.f32 %v590, %v591
        %v593 = vrot.slane %v570, 4
        %v594 = vadd.f32 %v570, %v593
        %v595 = vrot.slane %v594, 2
        %v596 = vadd.f32 %v594, %v595
        %v597 = vrot.slane %v596, 1
        %v598 = vadd.f32 %v596, %v597
        %v599 = vrot.slane %v571, 4
        %v600 = vadd.f32 %v571, %v599
        %v601 = vrot.slane %v600, 2
        %v602 = vadd.f32 %v600, %v601
        %v603 = vrot.slane %v602, 1
        %v604 = vadd.f32 %v602, %v603
        %v605 = vrot.slane %v572, 4
        %v606 = vadd.f32 %v572, %v605
        %v607 = vrot.slane %v606, 2
        %v608 = vadd.f32 %v606, %v607
        %v609 = vrot.slane %v608, 1
        %v610 = vadd.f32 %v608, %v609
        %v611 = vrot.slane %v573, 4
        %v612 = vadd.f32 %v573, %v611
        %v613 = vrot.slane %v612, 2
        %v614 = vadd.f32 %v612, %v613
        %v615 = vrot.slane %v614, 1
        %v616 = vadd.f32 %v614, %v615
        %v617 = vrot.slane %v574, 4
        %v618 = vadd.f32 %v574, %v617
        %v619 = vrot.slane %v618, 2
        %v620 = vadd.f32 %v618, %v619
        %v621 = vrot.slane %v620, 1
        %v622 = vadd.f32 %v620, %v621
        %vm631 = vcmask 1041409
        %v632 = vsel %vm631, %v586, %v580
        %vm633 = vcmask 1042434
        %v634 = vsel %vm633, %v592, %v632
        %vm635 = vcmask 1043459
        %v636 = vsel %vm635, %v598, %v634
        %vm637 = vcmask 1044484
        %v638 = vsel %vm637, %v604, %v636
        %vm639 = vcmask 1045509
        %v640 = vsel %vm639, %v610, %v638
        %vm641 = vcmask 1046534
        %v642 = vsel %vm641, %v616, %v640
        %vm643 = vcmask 1047559
        %v644 = vsel %vm643, %v622, %v642
        %646 = vst [vmem:[#allocation2] sm:$0xff] %v644
        %v647 = vld [vmem:[#allocation2] sm:$0xff]
        %v648 = vpack.c.bf16 %v647, %v647
        %v649 = vld [vmem:[%s3] sm:$0xf]
        %v650 = vld [vmem:[%s3 + $0x4] sm:$0xf]
        %v651 = vld [vmem:[%s3 + $0x8] sm:$0xf]
        %v652 = vld [vmem:[%s3 + $0xc] sm:$0xf]
        %v653 = vld [vmem:[%s3 + $0x10] sm:$0xf]
        %v654 = vld [vmem:[%s3 + $0x14] sm:$0xf]
        %v655 = vld [vmem:[%s3 + $0x18] sm:$0xf]
        %v656 = vld [vmem:[%s3 + $0x1c] sm:$0xf]
        %v657 = vld [vmem:[%s3 + $0x20] sm:$0xf]
        %v658 = vld [vmem:[%s3 + $0x24] sm:$0xf]
        %v659 = vld [vmem:[%s3 + $0x28] sm:$0xf]
        %v660 = vld [vmem:[%s3 + $0x2c] sm:$0xf]
        %v661 = vld [vmem:[%s3 + $0x30] sm:$0xf]
        %v662 = vld [vmem:[%s3 + $0x34] sm:$0xf]
        %v663 = vld [vmem:[%s3 + $0x38] sm:$0xf]
        %v664 = vld [vmem:[%s3 + $0x3c] sm:$0xf]
        %v665 = vld [vmem:[%s4] sm:$0x1]
        %v667 = vperm.slane %v665, 0
        %v685 = vunpack.c.l.b16 %v649
        %v686 = vunpack.c.l.b16 %v650
        %v687 = vunpack.c.l.b16 %v651
        %v688 = vunpack.c.l.b16 %v652
        %v689 = vunpack.c.l.b16 %v653
        %v690 = vunpack.c.l.b16 %v654
        %v691 = vunpack.c.l.b16 %v655
        %v692 = vunpack.c.l.b16 %v656
        %v693 = vunpack.c.l.b16 %v657
        %v694 = vunpack.c.l.b16 %v658
        %v695 = vunpack.c.l.b16 %v659
        %v696 = vunpack.c.l.b16 %v660
        %v697 = vunpack.c.l.b16 %v661
        %v698 = vunpack.c.l.b16 %v662
        %v699 = vunpack.c.l.b16 %v663
        %v700 = vunpack.c.l.b16 %v664
        %v701 = vpack.c.b16 %v686, %v685
        %v702 = vpack.c.b16 %v688, %v687
        %v703 = vpack.c.b16 %v690, %v689
        %v704 = vpack.c.b16 %v692, %v691
        %v705 = vpack.c.b16 %v694, %v693
        %v706 = vpack.c.b16 %v696, %v695
        %v707 = vpack.c.b16 %v698, %v697
        %v708 = vpack.c.b16 %v700, %v699
        %717 = vmatpush.bf16.msra.mxu0 %v708
        %718 = vmatpush.bf16.msra.mxu0 %v707
        %719 = vmatpush.bf16.msra.mxu0 %v706
        %720 = vmatpush.bf16.msra.mxu0 %v705
        %721 = vmatpush.bf16.msra.mxu0 %v704
        %722 = vmatpush.bf16.msra.mxu0 %v703
        %723 = vmatpush.bf16.msra.mxu0 %v702
        %724 = vmatpush.bf16.msra.mxu0 %v701
        %725 = vmatmul.bf16.gmra.mxu0 %v648
        %v726 = vpop.f32.mrf.mxu0
        %v727 = vadd.f32 %v667, %v726
        %v728 = vpop.f32.mrf.mxu0
        %729 = vdwg.mxu0
        %v730 = vpack.c.bf16 %v727, %v727
        %v731 = vld [vmem:[%s5] sm:$0xf]
        %v732 = vld [vmem:[%s5 + $0x4] sm:$0xf]
        %v733 = vld [vmem:[%s5 + $0x8] sm:$0xf]
        %v734 = vld [vmem:[%s5 + $0xc] sm:$0xf]
        %v735 = vld [vmem:[%s5 + $0x10] sm:$0xf]
        %v736 = vld [vmem:[%s5 + $0x14] sm:$0xf]
        %v737 = vld [vmem:[%s5 + $0x18] sm:$0xf]
        %v738 = vld [vmem:[%s5 + $0x1c] sm:$0xf]
        %v739 = vld [vmem:[%s5 + $0x20] sm:$0xf]
        %v740 = vld [vmem:[%s5 + $0x24] sm:$0xf]
        %v741 = vld [vmem:[%s5 + $0x28] sm:$0xf]
        %v742 = vld [vmem:[%s5 + $0x2c] sm:$0xf]
        %v743 = vld [vmem:[%s5 + $0x30] sm:$0xf]
        %v744 = vld [vmem:[%s5 + $0x34] sm:$0xf]
        %v745 = vld [vmem:[%s5 + $0x38] sm:$0xf]
        %v746 = vld [vmem:[%s5 + $0x3c] sm:$0xf]
        %v747 = vld [vmem:[%s6] sm:$0x1]
        %v749 = vperm.slane %v747, 0
        %v767 = vunpack.c.l.b16 %v731
        %v768 = vunpack.c.l.b16 %v732
        %v769 = vunpack.c.l.b16 %v733
        %v770 = vunpack.c.l.b16 %v734
        %v771 = vunpack.c.l.b16 %v735
        %v772 = vunpack.c.l.b16 %v736
        %v773 = vunpack.c.l.b16 %v737
        %v774 = vunpack.c.l.b16 %v738
        %v775 = vunpack.c.l.b16 %v739
        %v776 = vunpack.c.l.b16 %v740
        %v777 = vunpack.c.l.b16 %v741
        %v778 = vunpack.c.l.b16 %v742
        %v779 = vunpack.c.l.b16 %v743
        %v780 = vunpack.c.l.b16 %v744
        %v781 = vunpack.c.l.b16 %v745
        %v782 = vunpack.c.l.b16 %v746
        %v783 = vpack.c.b16 %v768, %v767
        %v784 = vpack.c.b16 %v770, %v769
        %v785 = vpack.c.b16 %v772, %v771
        %v786 = vpack.c.b16 %v774, %v773
        %v787 = vpack.c.b16 %v776, %v775
        %v788 = vpack.c.b16 %v778, %v777
        %v789 = vpack.c.b16 %v780, %v779
        %v790 = vpack.c.b16 %v782, %v781
        %799 = vmatpush.bf16.msra.mxu0 %v790
        %800 = vmatpush.bf16.msra.mxu0 %v789
        %801 = vmatpush.bf16.msra.mxu0 %v788
        %802 = vmatpush.bf16.msra.mxu0 %v787
        %803 = vmatpush.bf16.msra.mxu0 %v786
        %804 = vmatpush.bf16.msra.mxu0 %v785
        %805 = vmatpush.bf16.msra.mxu0 %v784
        %806 = vmatpush.bf16.msra.mxu0 %v783
        %807 = vmatmul.bf16.gmra.mxu0 %v730
        %v808 = vpop.f32.mrf.mxu0
        %v809 = vadd.f32 %v749, %v808
        %v810 = vpop.f32.mrf.mxu0
        %811 = vdwg.mxu0
        %v812 = vmax.f32 %v809, 0.0
        %v813 = vpack.c.bf16 %v812, %v812
        %v814 = vld [vmem:[#allocation3] sm:$0xf]
        %v815 = vld [vmem:[#allocation3 + $0x4] sm:$0xf]
        %v816 = vld [vmem:[#allocation3 + $0x8] sm:$0xf]
        %v817 = vld [vmem:[#allocation3 + $0xc] sm:$0xf]
        %v818 = vld [vmem:[#allocation3 + $0x10] sm:$0xf]
        %v819 = vld [vmem:[#allocation3 + $0x14] sm:$0xf]
        %v820 = vld [vmem:[#allocation3 + $0x18] sm:$0xf]
        %v821 = vld [vmem:[#allocation3 + $0x1c] sm:$0xf]
        %v822 = vld [vmem:[#allocation3 + $0x20] sm:$0xf]
        %v823 = vld [vmem:[#allocation3 + $0x24] sm:$0xf]
        %v824 = vld [vmem:[#allocation3 + $0x28] sm:$0xf]
        %v825 = vld [vmem:[#allocation3 + $0x2c] sm:$0xf]
        %v826 = vld [vmem:[#allocation3 + $0x30] sm:$0xf]
        %v827 = vld [vmem:[#allocation3 + $0x34] sm:$0xf]
        %v828 = vld [vmem:[#allocation3 + $0x38] sm:$0xf]
        %v829 = vld [vmem:[#allocation3 + $0x3c] sm:$0xf]
        %v830 = vld [vmem:[%s8] sm:$0x1]
        %v832 = vperm.slane %v830, 0
        %v850 = vunpack.c.l.b16 %v814
        %v851 = vunpack.c.l.b16 %v815
        %v852 = vunpack.c.l.b16 %v816
        %v853 = vunpack.c.l.b16 %v817
        %v854 = vunpack.c.l.b16 %v818
        %v855 = vunpack.c.l.b16 %v819
        %v856 = vunpack.c.l.b16 %v820
        %v857 = vunpack.c.l.b16 %v821
        %v858 = vunpack.c.l.b16 %v822
        %v859 = vunpack.c.l.b16 %v823
        %v860 = vunpack.c.l.b16 %v824
        %v861 = vunpack.c.l.b16 %v825
        %v862 = vunpack.c.l.b16 %v826
        %v863 = vunpack.c.l.b16 %v827
        %v864 = vunpack.c.l.b16 %v828
        %v865 = vunpack.c.l.b16 %v829
        %v866 = vpack.c.b16 %v851, %v850
        %v867 = vpack.c.b16 %v853, %v852
        %v868 = vpack.c.b16 %v855, %v854
        %v869 = vpack.c.b16 %v857, %v856
        %v870 = vpack.c.b16 %v859, %v858
        %v871 = vpack.c.b16 %v861, %v860
        %v872 = vpack.c.b16 %v863, %v862
        %v873 = vpack.c.b16 %v865, %v864
        %882 = vmatpush.bf16.msra.mxu0 %v873
        %883 = vmatpush.bf16.msra.mxu0 %v872
        %884 = vmatpush.bf16.msra.mxu0 %v871
        %885 = vmatpush.bf16.msra.mxu0 %v870
        %886 = vmatpush.bf16.msra.mxu0 %v869
        %887 = vmatpush.bf16.msra.mxu0 %v868
        %888 = vmatpush.bf16.msra.mxu0 %v867
        %889 = vmatpush.bf16.msra.mxu0 %v866
        %890 = vmatmul.bf16.gmra.mxu0 %v813
        %v891 = vpop.f32.mrf.mxu0
        %v892 = vadd.f32 %v832, %v891
        %v893 = vpop.f32.mrf.mxu0
        %894 = vdwg.mxu0
        %895 = vst [vmem:[%s343] sm:$0xff] %v892
        %s896 = sand.u32 %s226, 1
        %s897 = scalar_lea.sflag [#allocation5], %s896
        %s898 = sand.u32 %s226, 1
        %s899 = smul.addr %s898, 8
        %s900 = scalar_lea.vmem [#allocation6], %s899
        // Predicated region
        $region61: #{tpu_custom_call.1} parent=55 // pred_check
          %p901 = pneg %p236
        $region62: #{tpu_custom_call.1} parent=55 // pred_check_branch
          %903 = sbr.rel (%p901) target = $region64
        $region63: #{tpu_custom_call.1} parent=55 // pred_region
          %905 = vsyncadd %s897, 0
          %s906 = smul.addr %s24, 8
          %s907 = scalar_lea.hbm %s9, %s906
          %s909 = sshll.u32 %s900, 4
          %s910 = int_to_ptr.vmem [resolvable:$true] %s909
          %s911 = sshll.u32 %s907, 4
          %s912 = int_to_ptr.hbm [resolvable:$true] %s911
          %914 = dma.vmem_to_hbm [thread:$0]  %s910, 128, %s912, %s897
        $region64: #{tpu_custom_call.1} parent=55 // pred_fallthru
          _
      $region56: #{tpu_custom_call.1} parent=5 // pred_fallthru
        _
      %p915 = scmp.le.s32.totalorder 2, %s19
      // Predicated region
      $region65: #{tpu_custom_call.1} parent=5 // pred_check
        %p916 = pneg %p915
      $region66: #{tpu_custom_call.1} parent=5 // pred_check_branch
        %918 = sbr.rel (%p916) target = $region68
      $region67: #{tpu_custom_call.1} parent=5 // pred_region
        %s919 = ssub.s32 %s19, 2
        // Predicated region
        $region69: #{tpu_custom_call.1} parent=67 // pred_check
          %p920 = pneg %p242
        $region70: #{tpu_custom_call.1} parent=67 // pred_check_branch
          %922 = sbr.rel (%p920) target = $region72
        $region71: #{tpu_custom_call.1} parent=67 // pred_region
          %s923 = sand.u32 %s227, 1
          %s924 = scalar_lea.sflag [#allocation5], %s923
          %s925 = sand.u32 %s227, 1
          %s926 = smul.addr %s925, 8
          %s927 = scalar_lea.vmem [#allocation6], %s926
          %929 = dma.done %s924, 128
        $region72: #{tpu_custom_call.1} parent=67 // pred_fallthru
          _
      $region68: #{tpu_custom_call.1} parent=5 // pred_fallthru
        _
    $region6: #{tpu_custom_call.1} parent=1 // loop_footer
      %s23 = sadd.s32 1, %s19
    $region7: #{tpu_custom_call.1} parent=1 // loop_footer_branch
      %18 = sbr.rel target = $region3
    $region8: #{tpu_custom_call.1} parent=1 // loop_exit
      _
    %930 = vsyncpa [#allocation4], 1
    %s931 = scalar_lea.sflag [#allocation4], 1
    %932 = vsyncpa %s931, 1
    %933 = vsyncpa [#allocation5], 1
    %s934 = scalar_lea.sflag [#allocation5], 1
    %935 = vsyncpa %s934, 1

</llo_original>
